<compile_context>
chip_gen: v6e
topology: v6e:2x2x1
jax: 0.10.0
libtpu: 0.0.40
codegen_flags: <defaults>
</compile_context>

<pallas_src>
import functools

import jax
import jax.numpy as jnp
from jax.experimental import pallas as pl
from jax.experimental.pallas import tpu as pltpu

LANE = 128        # TPU lane width: pad the tiny output dim (2) to one full vreg row
NEG_INF = -1e30   # finite "-inf" for the padded logit lanes


def _round_up(n, m):
    return ((n + m - 1) // m) * m


def mlp_logsoftmax_kernel(x_ref, w1_ref, b1_ref, w2_ref, b2_ref,
                          wo_ref, bo_ref, out_ref, *, out_n):
    # Hidden layer 1: Linear -> ReLU (dropout == identity at inference).
    # MXU operands are cast to the weight dtype; accumulation stays f32.
    x = x_ref[...]
    h = jnp.dot(x.astype(w1_ref.dtype), w1_ref[...],
                preferred_element_type=jnp.float32) + b1_ref[...]
    h = jnp.maximum(h, 0.0)

    # Hidden layer 2: Linear -> ReLU
    h = jnp.dot(h.astype(w2_ref.dtype), w2_ref[...],
                preferred_element_type=jnp.float32) + b2_ref[...]
    h = jnp.maximum(h, 0.0)

    # Output layer, lane-dense in-vreg: wo/bo are padded to 128 output columns.
    # Padded weight cols are zero and padded bias lanes are NEG_INF, so those lanes
    # behave as -inf in the max / sum-exp reductions below.
    logits = jnp.dot(h.astype(wo_ref.dtype), wo_ref[...],
                     preferred_element_type=jnp.float32) + bo_ref[...]

    # log_softmax along dim=1 (numerically stable) on a full 128-lane vreg row.
    m = jnp.max(logits, axis=1, keepdims=True)
    shifted = logits - m
    lse = jnp.log(jnp.sum(jnp.exp(shifted), axis=1, keepdims=True))

    # Store only the real output columns: cuts HBM writeback ~64x vs the padded
    # f32 slab; the lane-select before the masked store is a handful of vreg ops.
    out_ref[...] = (shifted - lse)[:, :out_n].astype(out_ref.dtype)


def prepare_params(params, *, use_bf16=False, lane_pad=LANE):
    """Pad the output layer to a lane-dense 128-wide slab; optionally cast matmul
    weights to bf16 (f32 by default: accuracy-sensitive head, not MXU-bound)."""
    wo, bo = params["wo"], params["bo"]
    out_size = wo.shape[1]
    pad = _round_up(out_size, lane_pad) - out_size
    wo_p = jnp.pad(wo, ((0, 0), (0, pad)))                            # zero weight cols
    bo_p = jnp.pad(bo, ((0, 0), (0, pad)), constant_values=NEG_INF)   # -inf-like lanes
    wdt = jnp.bfloat16 if use_bf16 else jnp.float32
    return {
        "w1": params["w1"].astype(wdt), "b1": params["b1"],
        "w2": params["w2"].astype(wdt), "b2": params["b2"],
        "wo": wo_p.astype(wdt), "bo": bo_p,
    }


def _pick_batch_tile(B, tile_b):
    """8-aligned batch tile that (a) avoids padding whenever possible and
    (b) yields >= 2 grid steps when that costs no extra padding (feeds both
    TensorCores on v7x; harmless on v5e/v6e)."""
    b8 = _round_up(B, 8)
    if b8 > tile_b:
        # Balance the tiles so the last one carries at most 7 padded rows.
        n_tiles = -(-b8 // tile_b)
        return _round_up(-(-b8 // n_tiles), 8)
    half = b8 // 2
    if half >= 8 and half % 8 == 0:
        return half           # 2 equal tiles, still no padding beyond the 8-row round-up
    return b8                 # single tile, no padding


@functools.partial(jax.jit, static_argnames=("output_size", "tile_b"))
def my_classifier_forward(x, prep, output_size, tile_b=4096):
    """x: [B, input_size] float32; prep: output of prepare_params."""
    B, in_f = x.shape
    h1 = prep["w1"].shape[1]
    h2 = prep["w2"].shape[1]
    pad_n = prep["wo"].shape[1]          # lane-dense padded logit width (128)

    tb = _pick_batch_tile(B, tile_b)
    b_pad = _round_up(B, tb)
    if b_pad != B:                        # rare: only when B isn't a multiple of tb
        x = jnp.pad(x, ((0, b_pad - B), (0, 0)))
    grid = (b_pad // tb,)

    flops = 2 * b_pad * (in_f * h1 + h1 * h2 + h2 * pad_n)
    transcendentals = b_pad * pad_n      # exp over the padded logit lanes
    bytes_accessed = (
        b_pad * in_f * x.dtype.itemsize
        + b_pad * output_size * 4        # narrowed output writeback
        + sum(int(p.size) * p.dtype.itemsize for p in prep.values()))

    kernel = functools.partial(mlp_logsoftmax_kernel, out_n=output_size)

    out = pl.pallas_call(
        kernel,
        out_shape=jax.ShapeDtypeStruct((b_pad, output_size), jnp.float32),
        grid_spec=pltpu.PrefetchScalarGridSpec(
            num_scalar_prefetch=0,
            grid=grid,
            in_specs=[
                pl.BlockSpec((tb, in_f), lambda i: (i, 0)),      # x: tiled along batch
                pl.BlockSpec((in_f, h1), lambda i: (0, 0)),      # weights/biases: resident
                pl.BlockSpec((1, h1), lambda i: (0, 0)),
                pl.BlockSpec((h1, h2), lambda i: (0, 0)),
                pl.BlockSpec((1, h2), lambda i: (0, 0)),
                pl.BlockSpec((h2, pad_n), lambda i: (0, 0)),
                pl.BlockSpec((1, pad_n), lambda i: (0, 0)),
            ],
            out_specs=pl.BlockSpec((tb, output_size), lambda i: (i, 0)),
        ),
        compiler_params=pltpu.CompilerParams(
            dimension_semantics=("parallel",)),
        cost_estimate=pl.CostEstimate(
            flops=flops,
            transcendentals=transcendentals,
            bytes_accessed=bytes_accessed),
    )(x, prep["w1"], prep["b1"], prep["w2"], prep["b2"], prep["wo"], prep["bo"])

    return out if b_pad == B else out[:B]


def init_params(key, input_size, hidden_layers, output_size):
    """Deterministic init matching nn.Linear shapes (stored as [in, out])."""
    ks = jax.random.split(key, 6)
    h1, h2 = hidden_layers

    def lin(kw, kb, fan_in, fan_out):
        bound = 1.0 / jnp.sqrt(fan_in)
        w = jax.random.uniform(kw, (fan_in, fan_out), jnp.float32, -bound, bound)
        b = jax.random.uniform(kb, (1, fan_out), jnp.float32, -bound, bound)
        return w, b

    w1, b1 = lin(ks[0], ks[1], input_size, h1)
    w2, b2 = lin(ks[2], ks[3], h1, h2)
    wo, bo = lin(ks[4], ks[5], h2, output_size)
    return {"w1": w1, "b1": b1, "w2": w2, "b2": b2, "wo": wo, "bo": bo}


def reference_forward(x, p):
    """Pure f32 reference matching the PyTorch module's inference forward."""
    h = jnp.maximum(x @ p["w1"] + p["b1"], 0.0)
    h = jnp.maximum(h @ p["w2"] + p["b2"], 0.0)
    logits = h @ p["wo"] + p["bo"]
    return jax.nn.log_softmax(logits, axis=1)


if __name__ == "__main__":
    # TODO(synk): dropout is only active in training mode; the inference forward
    # (dropout == identity) is what is implemented here.
    input_size = 32
    hidden_layers = [64, 32]
    output_size = 2
    dropout_p = 0.2  # unused at inference
    batch = 8

    key = jax.random.PRNGKey(0)
    kx, kp, kx2 = jax.random.split(key, 3)
    x = jax.random.normal(kx, (batch, input_size), dtype=jnp.float32)
    params = init_params(kp, input_size, hidden_layers, output_size)
    prep = prepare_params(params, use_bf16=False)   # f32 weights: accurate & free here

    # Small-batch path: single tile, no padding, no wrapper-side slice.
    out = my_classifier_forward(x, prep, output_size)
    jax.block_until_ready(out)
    assert out.shape == (batch, output_size)
    ref = reference_forward(x, params)
    # Tolerance covers XLA-default-precision vs MXU pass-count rounding differences.
    assert jnp.allclose(out, ref, atol=3e-2, rtol=3e-2), \
        float(jnp.max(jnp.abs(out - ref)))
    # Property check: rows are valid log-probabilities.
    assert jnp.allclose(jnp.sum(jnp.exp(out), axis=1), 1.0, atol=1e-3)

    # Multi-tile path (grid >= 2, two 120-row tiles, still no padding).
    x2 = jax.random.normal(kx2, (240, input_size), dtype=jnp.float32)
    out2 = my_classifier_forward(x2, prep, output_size)
    jax.block_until_ready(out2)
    ref2 = reference_forward(x2, params)
    assert out2.shape == (240, output_size)
    assert jnp.allclose(out2, ref2, atol=3e-2, rtol=3e-2), \
        float(jnp.max(jnp.abs(out2 - ref2)))
    assert jnp.allclose(jnp.sum(jnp.exp(out2), axis=1), 1.0, atol=1e-3)

    print("KERNEL_OK")
</pallas_src>

<mosaic_0001>
module attributes {stable_mosaic.version = 11 : i64} {
  func.func @mlp_logsoftmax_kernel(%arg0: i32, %arg1: memref<8x32xf32, #tpu.memory_space<vmem>>, %arg2: memref<32x64xf32, #tpu.memory_space<vmem>>, %arg3: memref<1x64xf32, #tpu.memory_space<vmem>>, %arg4: memref<64x32xf32, #tpu.memory_space<vmem>>, %arg5: memref<1x32xf32, #tpu.memory_space<vmem>>, %arg6: memref<32x128xf32, #tpu.memory_space<vmem>>, %arg7: memref<1x128xf32, #tpu.memory_space<vmem>>, %arg8: memref<8x2xf32, #tpu.memory_space<vmem>>) attributes {dimension_semantics = [#tpu.dimension_semantics<parallel>], iteration_bounds = array<i64: 1>, scalar_prefetch = 0 : i64, scratch_operands = 0 : i64, tpu.core_type = #tpu.core_type<tc>, window_params = [{transform_indices = @transform_0, window_bounds = array<i64: 8, 32>}, {pipeline_mode = #tpu.pipeline_mode<synchronous>, transform_indices = @transform_1, window_bounds = array<i64: 32, 64>}, {pipeline_mode = #tpu.pipeline_mode<synchronous>, transform_indices = @transform_2, window_bounds = array<i64: 1, 64>}, {pipeline_mode = #tpu.pipeline_mode<synchronous>, transform_indices = @transform_3, window_bounds = array<i64: 64, 32>}, {pipeline_mode = #tpu.pipeline_mode<synchronous>, transform_indices = @transform_4, window_bounds = array<i64: 1, 32>}, {pipeline_mode = #tpu.pipeline_mode<synchronous>, transform_indices = @transform_5, window_bounds = array<i64: 32, 128>}, {pipeline_mode = #tpu.pipeline_mode<synchronous>, transform_indices = @transform_6, window_bounds = array<i64: 1, 128>}, {transform_indices = @transform_7, window_bounds = array<i64: 8, 2>}]} {
    %c0 = arith.constant 0 : index
    %c0_0 = arith.constant 0 : index
    %0 = vector.load %arg1[%c0, %c0_0] : memref<8x32xf32, #tpu.memory_space<vmem>>, vector<8x32xf32>
    %c0_1 = arith.constant 0 : index
    %c0_2 = arith.constant 0 : index
    %1 = vector.load %arg2[%c0_1, %c0_2] : memref<32x64xf32, #tpu.memory_space<vmem>>, vector<32x64xf32>
    %cst = arith.constant dense<0.000000e+00> : vector<8x64xf32>
    %2 = tpu.matmul %0, %1, %cst {dimension_numbers = #tpu.dot_dimension_numbers<[1], [0], [0], [1], [0, 0, 1, 1], [], []>} : vector<8x32xf32>, vector<32x64xf32>, vector<8x64xf32> -> vector<8x64xf32>
    %c0_3 = arith.constant 0 : index
    %c0_4 = arith.constant 0 : index
    %3 = vector.load %arg3[%c0_3, %c0_4] : memref<1x64xf32, #tpu.memory_space<vmem>>, vector<1x64xf32>
    %4 = vector.broadcast %3 : vector<1x64xf32> to vector<8x64xf32>
    %5 = arith.addf %2, %4 : vector<8x64xf32>
    %cst_5 = arith.constant 0.000000e+00 : f32
    %6 = vector.broadcast %cst_5 : f32 to vector<8x64xf32>
    %7 = arith.maximumf %5, %6 : vector<8x64xf32>
    %c0_6 = arith.constant 0 : index
    %c0_7 = arith.constant 0 : index
    %8 = vector.load %arg4[%c0_6, %c0_7] : memref<64x32xf32, #tpu.memory_space<vmem>>, vector<64x32xf32>
    %cst_8 = arith.constant dense<0.000000e+00> : vector<8x32xf32>
    %9 = tpu.matmul %7, %8, %cst_8 {dimension_numbers = #tpu.dot_dimension_numbers<[1], [0], [0], [1], [0, 0, 1, 1], [], []>} : vector<8x64xf32>, vector<64x32xf32>, vector<8x32xf32> -> vector<8x32xf32>
    %c0_9 = arith.constant 0 : index
    %c0_10 = arith.constant 0 : index
    %10 = vector.load %arg5[%c0_9, %c0_10] : memref<1x32xf32, #tpu.memory_space<vmem>>, vector<1x32xf32>
    %11 = vector.broadcast %10 : vector<1x32xf32> to vector<8x32xf32>
    %12 = arith.addf %9, %11 : vector<8x32xf32>
    %cst_11 = arith.constant 0.000000e+00 : f32
    %13 = vector.broadcast %cst_11 : f32 to vector<8x32xf32>
    %14 = arith.maximumf %12, %13 : vector<8x32xf32>
    %c0_12 = arith.constant 0 : index
    %c0_13 = arith.constant 0 : index
    %15 = vector.load %arg6[%c0_12, %c0_13] : memref<32x128xf32, #tpu.memory_space<vmem>>, vector<32x128xf32>
    %cst_14 = arith.constant dense<0.000000e+00> : vector<8x128xf32>
    %16 = tpu.matmul %14, %15, %cst_14 {dimension_numbers = #tpu.dot_dimension_numbers<[1], [0], [0], [1], [0, 0, 1, 1], [], []>} : vector<8x32xf32>, vector<32x128xf32>, vector<8x128xf32> -> vector<8x128xf32>
    %c0_15 = arith.constant 0 : index
    %c0_16 = arith.constant 0 : index
    %17 = vector.load %arg7[%c0_15, %c0_16] : memref<1x128xf32, #tpu.memory_space<vmem>>, vector<1x128xf32>
    %18 = vector.broadcast %17 : vector<1x128xf32> to vector<8x128xf32>
    %19 = arith.addf %16, %18 : vector<8x128xf32>
    %cst_17 = arith.constant dense<0xFF800000> : vector<8xf32>
    %20 = vector.multi_reduction <maximumf>, %19, %cst_17 [1] : vector<8x128xf32> to vector<8xf32>
    %21 = vector.shape_cast %20 : vector<8xf32> to vector<8x1xf32>
    %22 = vector.broadcast %21 : vector<8x1xf32> to vector<8x128xf32>
    %23 = arith.subf %19, %22 : vector<8x128xf32>
    %24 = math.exp %23 : vector<8x128xf32>
    %cst_18 = arith.constant dense<0.000000e+00> : vector<8xf32>
    %25 = vector.multi_reduction <add>, %24, %cst_18 [1] : vector<8x128xf32> to vector<8xf32>
    %26 = vector.shape_cast %25 : vector<8xf32> to vector<8x1xf32>
    %27 = math.log %26 : vector<8x1xf32>
    %28 = vector.broadcast %27 : vector<8x1xf32> to vector<8x128xf32>
    %29 = arith.subf %23, %28 : vector<8x128xf32>
    %30 = vector.extract_strided_slice %29 {offsets = [0, 0], sizes = [8, 2], strides = [1, 1]} : vector<8x128xf32> to vector<8x2xf32>
    %c0_19 = arith.constant 0 : index
    %c0_20 = arith.constant 0 : index
    %31 = vector.load %arg8[%c0_19, %c0_20] : memref<8x2xf32, #tpu.memory_space<vmem>>, vector<8x2xf32>
    tpu.vector_store %arg8[%c0_19, %c0_20], %30 {strides = array<i32>} : memref<8x2xf32, #tpu.memory_space<vmem>>, vector<8x2xf32>,
    return
  }
  func.func @transform_0(%arg0: i32) -> (i32, i32) {
    %c0_i32 = arith.constant 0 : i32
    %c0_i32_0 = arith.constant 0 : i32
    return %arg0, %c0_i32 : i32, i32
  }
  func.func @transform_1(%arg0: i32) -> (i32, i32) {
    %c0_i32 = arith.constant 0 : i32
    %c0_i32_0 = arith.constant 0 : i32
    %c0_i32_1 = arith.constant 0 : i32
    return %c0_i32, %c0_i32_0 : i32, i32
  }
  func.func @transform_2(%arg0: i32) -> (i32, i32) {
    %c0_i32 = arith.constant 0 : i32
    %c0_i32_0 = arith.constant 0 : i32
    %c0_i32_1 = arith.constant 0 : i32
    return %c0_i32, %c0_i32_0 : i32, i32
  }
  func.func @transform_3(%arg0: i32) -> (i32, i32) {
    %c0_i32 = arith.constant 0 : i32
    %c0_i32_0 = arith.constant 0 : i32
    %c0_i32_1 = arith.constant 0 : i32
    return %c0_i32, %c0_i32_0 : i32, i32
  }
  func.func @transform_4(%arg0: i32) -> (i32, i32) {
    %c0_i32 = arith.constant 0 : i32
    %c0_i32_0 = arith.constant 0 : i32
    %c0_i32_1 = arith.constant 0 : i32
    return %c0_i32, %c0_i32_0 : i32, i32
  }
  func.func @transform_5(%arg0: i32) -> (i32, i32) {
    %c0_i32 = arith.constant 0 : i32
    %c0_i32_0 = arith.constant 0 : i32
    %c0_i32_1 = arith.constant 0 : i32
    return %c0_i32, %c0_i32_0 : i32, i32
  }
  func.func @transform_6(%arg0: i32) -> (i32, i32) {
    %c0_i32 = arith.constant 0 : i32
    %c0_i32_0 = arith.constant 0 : i32
    %c0_i32_1 = arith.constant 0 : i32
    return %c0_i32, %c0_i32_0 : i32, i32
  }
  func.func @transform_7(%arg0: i32) -> (i32, i32) {
    %c0_i32 = arith.constant 0 : i32
    %c0_i32_0 = arith.constant 0 : i32
    return %arg0, %c0_i32 : i32, i32
  }
}

</mosaic_0001>

<llo_original>
// kernel: my_classifier_forward.1
$region0: #{my_classifier_forward.1}
  #allocation0 [shape = 'u32[]', space=smem, size = 0x4, offset = 0x4, fixed_abs, tag = 'smem constant byte address 0x4 - core index']
  #allocation1 [shape = 'u32[144,128]{1,0:T(1,128)}', space=vmem, size = 0x12000, scoped, tag = 'internal scratch']
  %s0 = inlined_call_operand.vmem [shape: f32[8,32], index: 0, kind: input, shape index: {}]
  %s1 = inlined_call_operand.vmem [shape: f32[32,64], index: 1, kind: input, shape index: {}]
  %s2 = inlined_call_operand.vmem [shape: f32[1,64], index: 2, kind: input, shape index: {}]
  %s3 = inlined_call_operand.vmem [shape: f32[64,32], index: 3, kind: input, shape index: {}]
  %s4 = inlined_call_operand.vmem [shape: f32[1,32], index: 4, kind: input, shape index: {}]
  %s5 = inlined_call_operand.vmem [shape: f32[32,128], index: 5, kind: input, shape index: {}]
  %s6 = inlined_call_operand.vmem [shape: f32[1,128], index: 6, kind: input, shape index: {}]
  %s7 = inlined_call_operand.vmem [shape: f32[8,2], index: 7, kind: output, shape index: {}]
  %s8 = sld [smem:[#allocation0]]
  $region38: #{my_classifier_forward.1} parent=0
    _
  %s10 = ssub.s32 1, %s8
  %s11 = scalar_select 0, %s10, %s8
  // Predicated region
  $region2: #{my_classifier_forward.1} parent=0 // pred_check
    _
  $region3: #{my_classifier_forward.1} parent=0 // pred_check_branch
    %13 = sbr.rel (0) target = $region5
  $region4: #{my_classifier_forward.1} parent=0 // pred_region
    _
  $region5: #{my_classifier_forward.1} parent=0 // pred_fallthru
    _
  // Predicated region
  $region6: #{my_classifier_forward.1} parent=0 // pred_check
    _
  $region7: #{my_classifier_forward.1} parent=0 // pred_check_branch
    %15 = sbr.rel (0) target = $region9
  $region8: #{my_classifier_forward.1} parent=0 // pred_region
    _
  $region9: #{my_classifier_forward.1} parent=0 // pred_fallthru
    _
  // Predicated region
  $region10: #{my_classifier_forward.1} parent=0 // pred_check
    _
  $region11: #{my_classifier_forward.1} parent=0 // pred_check_branch
    %17 = sbr.rel (0) target = $region13
  $region12: #{my_classifier_forward.1} parent=0 // pred_region
    _
  $region13: #{my_classifier_forward.1} parent=0 // pred_fallthru
    _
  // Predicated region
  $region14: #{my_classifier_forward.1} parent=0 // pred_check
    _
  $region15: #{my_classifier_forward.1} parent=0 // pred_check_branch
    %19 = sbr.rel (0) target = $region17
  $region16: #{my_classifier_forward.1} parent=0 // pred_region
    _
  $region17: #{my_classifier_forward.1} parent=0 // pred_fallthru
    _
  // Predicated region
  $region18: #{my_classifier_forward.1} parent=0 // pred_check
    _
  $region19: #{my_classifier_forward.1} parent=0 // pred_check_branch
    %21 = sbr.rel (0) target = $region21
  $region20: #{my_classifier_forward.1} parent=0 // pred_region
    _
  $region21: #{my_classifier_forward.1} parent=0 // pred_fallthru
    _
  // Predicated region
  $region22: #{my_classifier_forward.1} parent=0 // pred_check
    _
  $region23: #{my_classifier_forward.1} parent=0 // pred_check_branch
    %23 = sbr.rel (0) target = $region25
  $region24: #{my_classifier_forward.1} parent=0 // pred_region
    _
  $region25: #{my_classifier_forward.1} parent=0 // pred_fallthru
    _
  // Predicated region
  $region26: #{my_classifier_forward.1} parent=0 // pred_check
    _
  $region27: #{my_classifier_forward.1} parent=0 // pred_check_branch
    %25 = sbr.rel (0) target = $region29
  $region28: #{my_classifier_forward.1} parent=0 // pred_region
    _
  $region29: #{my_classifier_forward.1} parent=0 // pred_fallthru
    _
  %v26 = vld [vmem:[%s0] sm:$0xff]
  %v27 = vld [vmem:[%s1] sm:$0xff]
  %v28 = vld [vmem:[%s1 + $0x8] sm:$0xff]
  %v29 = vld [vmem:[%s1 + $0x10] sm:$0xff]
  %v30 = vld [vmem:[%s1 + $0x18] sm:$0xff]
  %v31 = vld [vmem:[%s2] sm:$0x1]
  %v33 = vlaneseq
  %v34 = vshrl.u32 %v33, 7
  %v35 = vsub.s32 0, %v34
  %v36 = vrot.slane %v31, %v35
  %vm38 = vcmask 261120
  %v40 = vsel %vm38, %v26, 0
  %42 = vmatprep.subr.mxu0 0.0
  %43 = vmatpush1.msra.mxu0 0.0
  %44 = vmatprep.subr.mxu0 0.0
  %45 = vmatpush1.msra.mxu0 0.0
  %46 = vmatprep.subr.mxu0 0.0
  %47 = vmatpush1.msra.mxu0 0.0
  %48 = vmatprep.subr.mxu0 0.0
  %49 = vmatpush1.msra.mxu0 0.0
  %50 = vmatprep.subr.mxu0 0.0
  %51 = vmatpush1.msra.mxu0 0.0
  %52 = vmatprep.subr.mxu0 0.0
  %53 = vmatpush1.msra.mxu0 0.0
  %54 = vmatprep.subr.mxu0 0.0
  %55 = vmatpush1.msra.mxu0 0.0
  %56 = vmatprep.subr.mxu0 0.0
  %57 = vmatpush1.msra.mxu0 0.0
  %58 = vmatprep.subr.mxu0 0.0
  %59 = vmatpush1.msra.mxu0 0.0
  %60 = vmatprep.subr.mxu0 0.0
  %61 = vmatpush1.msra.mxu0 0.0
  %62 = vmatprep.subr.mxu0 0.0
  %63 = vmatpush1.msra.mxu0 0.0
  %64 = vmatprep.subr.mxu0 0.0
  %65 = vmatpush1.msra.mxu0 0.0
  %66 = vmatprep.subr.mxu0 0.0
  %67 = vmatpush1.msra.mxu0 %v30
  %68 = vmatprep.subr.mxu0 0.0
  %69 = vmatpush1.msra.mxu0 %v29
  %70 = vmatprep.subr.mxu0 0.0
  %71 = vmatpush1.msra.mxu0 %v28
  %72 = vmatprep.subr.mxu0 0.0
  %73 = vmatpush1.msra.mxu0 %v27
  %74 = vmatprep.subr.mxu0 0.0
  %75 = vmatpush2.msra.mxu0 0.0
  %76 = vmatprep.subr.mxu0 0.0
  %77 = vmatpush2.msra.mxu0 0.0
  %78 = vmatprep.subr.mxu0 0.0
  %79 = vmatpush2.msra.mxu0 0.0
  %80 = vmatprep.subr.mxu0 0.0
  %81 = vmatpush2.msra.mxu0 0.0
  %82 = vmatprep.subr.mxu0 0.0
  %83 = vmatpush2.msra.mxu0 0.0
  %84 = vmatprep.subr.mxu0 0.0
  %85 = vmatpush2.msra.mxu0 0.0
  %86 = vmatprep.subr.mxu0 0.0
  %87 = vmatpush2.msra.mxu0 0.0
  %88 = vmatprep.subr.mxu0 0.0
  %89 = vmatpush2.msra.mxu0 0.0
  %90 = vmatprep.subr.mxu0 0.0
  %91 = vmatpush2.msra.mxu0 0.0
  %92 = vmatprep.subr.mxu0 0.0
  %93 = vmatpush2.msra.mxu0 0.0
  %94 = vmatprep.subr.mxu0 0.0
  %95 = vmatpush2.msra.mxu0 0.0
  %96 = vmatprep.subr.mxu0 0.0
  %97 = vmatpush2.msra.mxu0 0.0
  %98 = vmatprep.subr.mxu0 0.0
  %99 = vmatpush2.msra.mxu0 0.0
  %100 = vmatprep.subr.mxu0 0.0
  %101 = vmatpush2.msra.mxu0 0.0
  %102 = vmatprep.subr.mxu0 0.0
  %103 = vmatpush2.msra.mxu0 0.0
  %104 = vmatprep.subr.mxu0 0.0
  %105 = vmatpush2.msra.mxu0 0.0
  %106 = vmatprep.mubr.f32.mxu0 0.0
  %107 = vmatmul.mubr.f32.gmra.mxu0 %v40
  %v108 = vpop.f32.mrf.mxu0
  %v109 = vadd.f32 %v36, %v108
  %v110 = vpop.f32.mrf.mxu0
  %111 = vdwg.mxu0
  %v112 = vmax.f32 %v109, 0.0
  %v113 = vld [vmem:[%s3] sm:$0xff]
  %v114 = vld [vmem:[%s3 + $0x8] sm:$0xff]
  %v115 = vld [vmem:[%s3 + $0x10] sm:$0xff]
  %v116 = vld [vmem:[%s3 + $0x18] sm:$0xff]
  %v117 = vld [vmem:[%s3 + $0x20] sm:$0xff]
  %v118 = vld [vmem:[%s3 + $0x28] sm:$0xff]
  %v119 = vld [vmem:[%s3 + $0x30] sm:$0xff]
  %v120 = vld [vmem:[%s3 + $0x38] sm:$0xff]
  %v121 = vld [vmem:[%s4] sm:$0x1]
  %v123 = vlaneseq
  %v124 = vshrl.u32 %v123, 7
  %v125 = vsub.s32 0, %v124
  %v126 = vrot.slane %v121, %v125
  %vm128 = vcmask 523264
  %v130 = vsel %vm128, %v112, 0
  %132 = vmatprep.subr.mxu0 0.0
  %133 = vmatpush1.msra.mxu0 0.0
  %134 = vmatprep.subr.mxu0 0.0
  %135 = vmatpush1.msra.mxu0 0.0
  %136 = vmatprep.subr.mxu0 0.0
  %137 = vmatpush1.msra.mxu0 0.0
  %138 = vmatprep.subr.mxu0 0.0
  %139 = vmatpush1.msra.mxu0 0.0
  %140 = vmatprep.subr.mxu0 0.0
  %141 = vmatpush1.msra.mxu0 0.0
  %142 = vmatprep.subr.mxu0 0.0
  %143 = vmatpush1.msra.mxu0 0.0
  %144 = vmatprep.subr.mxu0 0.0
  %145 = vmatpush1.msra.mxu0 0.0
  %146 = vmatprep.subr.mxu0 0.0
  %147 = vmatpush1.msra.mxu0 0.0
  %148 = vmatprep.subr.mxu0 0.0
  %149 = vmatpush1.msra.mxu0 %v120
  %150 = vmatprep.subr.mxu0 0.0
  %151 = vmatpush1.msra.mxu0 %v119
  %152 = vmatprep.subr.mxu0 0.0
  %153 = vmatpush1.msra.mxu0 %v118
  %154 = vmatprep.subr.mxu0 0.0
  %155 = vmatpush1.msra.mxu0 %v117
  %156 = vmatprep.subr.mxu0 0.0
  %157 = vmatpush1.msra.mxu0 %v116
  %158 = vmatprep.subr.mxu0 0.0
  %159 = vmatpush1.msra.mxu0 %v115
  %160 = vmatprep.subr.mxu0 0.0
  %161 = vmatpush1.msra.mxu0 %v114
  %162 = vmatprep.subr.mxu0 0.0
  %163 = vmatpush1.msra.mxu0 %v113
  %164 = vmatprep.subr.mxu0 0.0
  %165 = vmatpush2.msra.mxu0 0.0
  %166 = vmatprep.subr.mxu0 0.0
  %167 = vmatpush2.msra.mxu0 0.0
  %168 = vmatprep.subr.mxu0 0.0
  %169 = vmatpush2.msra.mxu0 0.0
  %170 = vmatprep.subr.mxu0 0.0
  %171 = vmatpush2.msra.mxu0 0.0
  %172 = vmatprep.subr.mxu0 0.0
  %173 = vmatpush2.msra.mxu0 0.0
  %174 = vmatprep.subr.mxu0 0.0
  %175 = vmatpush2.msra.mxu0 0.0
  %176 = vmatprep.subr.mxu0 0.0
  %177 = vmatpush2.msra.mxu0 0.0
  %178 = vmatprep.subr.mxu0 0.0
  %179 = vmatpush2.msra.mxu0 0.0
  %180 = vmatprep.subr.mxu0 0.0
  %181 = vmatpush2.msra.mxu0 0.0
  %182 = vmatprep.subr.mxu0 0.0
  %183 = vmatpush2.msra.mxu0 0.0
  %184 = vmatprep.subr.mxu0 0.0
  %185 = vmatpush2.msra.mxu0 0.0
  %186 = vmatprep.subr.mxu0 0.0
  %187 = vmatpush2.msra.mxu0 0.0
  %188 = vmatprep.subr.mxu0 0.0
  %189 = vmatpush2.msra.mxu0 0.0
  %190 = vmatprep.subr.mxu0 0.0
  %191 = vmatpush2.msra.mxu0 0.0
  %192 = vmatprep.subr.mxu0 0.0
  %193 = vmatpush2.msra.mxu0 0.0
  %194 = vmatprep.subr.mxu0 0.0
  %195 = vmatpush2.msra.mxu0 0.0
  %196 = vmatprep.mubr.f32.mxu0 0.0
  %197 = vmatmul.mubr.f32.gmra.mxu0 %v130
  %v198 = vpop.f32.mrf.mxu0
  %v199 = vadd.f32 %v126, %v198
  %v200 = vpop.f32.mrf.mxu0
  %201 = vdwg.mxu0
  %v202 = vmax.f32 %v199, 0.0
  %v203 = vld [vmem:[%s5] sm:$0xff]
  %v204 = vld [vmem:[%s5 + $0x8] sm:$0xff]
  %v205 = vld [vmem:[%s5 + $0x10] sm:$0xff]
  %v206 = vld [vmem:[%s5 + $0x18] sm:$0xff]
  %v207 = vld [vmem:[%s6] sm:$0x1]
  %v209 = vlaneseq
  %v210 = vshrl.u32 %v209, 7
  %v211 = vsub.s32 0, %v210
  %v212 = vrot.slane %v207, %v211
  %v215 = vsel %vm38, %v202, 0
  %217 = vmatprep.subr.mxu0 0.0
  %218 = vmatpush1.msra.mxu0 0.0
  %219 = vmatprep.subr.mxu0 0.0
  %220 = vmatpush1.msra.mxu0 0.0
  %221 = vmatprep.subr.mxu0 0.0
  %222 = vmatpush1.msra.mxu0 0.0
  %223 = vmatprep.subr.mxu0 0.0
  %224 = vmatpush1.msra.mxu0 0.0
  %225 = vmatprep.subr.mxu0 0.0
  %226 = vmatpush1.msra.mxu0 0.0
  %227 = vmatprep.subr.mxu0 0.0
  %228 = vmatpush1.msra.mxu0 0.0
  %229 = vmatprep.subr.mxu0 0.0
  %230 = vmatpush1.msra.mxu0 0.0
  %231 = vmatprep.subr.mxu0 0.0
  %232 = vmatpush1.msra.mxu0 0.0
  %233 = vmatprep.subr.mxu0 0.0
  %234 = vmatpush1.msra.mxu0 0.0
  %235 = vmatprep.subr.mxu0 0.0
  %236 = vmatpush1.msra.mxu0 0.0
  %237 = vmatprep.subr.mxu0 0.0
  %238 = vmatpush1.msra.mxu0 0.0
  %239 = vmatprep.subr.mxu0 0.0
  %240 = vmatpush1.msra.mxu0 0.0
  %241 = vmatprep.subr.mxu0 0.0
  %242 = vmatpush1.msra.mxu0 %v206
  %243 = vmatprep.subr.mxu0 0.0
  %244 = vmatpush1.msra.mxu0 %v205
  %245 = vmatprep.subr.mxu0 0.0
  %246 = vmatpush1.msra.mxu0 %v204
  %247 = vmatprep.subr.mxu0 0.0
  %248 = vmatpush1.msra.mxu0 %v203
  %249 = vmatprep.subr.mxu0 0.0
  %250 = vmatpush2.msra.mxu0 0.0
  %251 = vmatprep.subr.mxu0 0.0
  %252 = vmatpush2.msra.mxu0 0.0
  %253 = vmatprep.subr.mxu0 0.0
  %254 = vmatpush2.msra.mxu0 0.0
  %255 = vmatprep.subr.mxu0 0.0
  %256 = vmatpush2.msra.mxu0 0.0
  %257 = vmatprep.subr.mxu0 0.0
  %258 = vmatpush2.msra.mxu0 0.0
  %259 = vmatprep.subr.mxu0 0.0
  %260 = vmatpush2.msra.mxu0 0.0
  %261 = vmatprep.subr.mxu0 0.0
  %262 = vmatpush2.msra.mxu0 0.0
  %263 = vmatprep.subr.mxu0 0.0
  %264 = vmatpush2.msra.mxu0 0.0
  %265 = vmatprep.subr.mxu0 0.0
  %266 = vmatpush2.msra.mxu0 0.0
  %267 = vmatprep.subr.mxu0 0.0
  %268 = vmatpush2.msra.mxu0 0.0
  %269 = vmatprep.subr.mxu0 0.0
  %270 = vmatpush2.msra.mxu0 0.0
  %271 = vmatprep.subr.mxu0 0.0
  %272 = vmatpush2.msra.mxu0 0.0
  %273 = vmatprep.subr.mxu0 0.0
  %274 = vmatpush2.msra.mxu0 0.0
  %275 = vmatprep.subr.mxu0 0.0
  %276 = vmatpush2.msra.mxu0 0.0
  %277 = vmatprep.subr.mxu0 0.0
  %278 = vmatpush2.msra.mxu0 0.0
  %279 = vmatprep.subr.mxu0 0.0
  %280 = vmatpush2.msra.mxu0 0.0
  %281 = vmatprep.mubr.f32.mxu0 0.0
  %282 = vmatmul.mubr.f32.gmra.mxu0 %v215
  %v283 = vpop.f32.mrf.mxu0
  %v284 = vadd.f32 %v212, %v283
  %v285 = vpop.f32.mrf.mxu0
  %286 = vdwg.mxu0
  %287 = vmax.xlane.f32.xlu0 %v284
  %v288 = vpop.xlane.xlu0 %287
  %v289 = vsub.f32 %v284, %v288
  %v290 = vmul.f32 %v289, 1.442695
  %v291 = vpow.pop %v290
  %292 = vadd.xlane.f32.xlu0 %v291
  %v293 = vpop.xlane.xlu0 %292
  %v294 = vlog2.pop %v293
  %v295 = vmul.f32 %v294, 0.6931472
  %v296 = vsub.f32 %v289, %v295
  %vm297 = vcmask 15360
  %298 = vst.msk [vmem:[%s7] sm:$0xff] %vm297, %v296
  // Predicated region
  $region30: #{my_classifier_forward.1} parent=0 // pred_check
    _
  $region31: #{my_classifier_forward.1} parent=0 // pred_check_branch
    %300 = sbr.rel (0) target = $region33
  $region32: #{my_classifier_forward.1} parent=0 // pred_region
    _
  $region33: #{my_classifier_forward.1} parent=0 // pred_fallthru
    _
  // Predicated region
  $region34: #{my_classifier_forward.1} parent=0 // pred_check
    _
  $region35: #{my_classifier_forward.1} parent=0 // pred_check_branch
    %302 = sbr.rel (0) target = $region37
  $region36: #{my_classifier_forward.1} parent=0 // pred_region
    _
  $region37: #{my_classifier_forward.1} parent=0 // pred_fallthru
    _

</llo_original>
